<compile_context>
chip_gen: v6e
topology: v6e:2x2x1
jax: 0.10.0
libtpu: 0.0.40
codegen_flags: <defaults>
</compile_context>

<pallas_src>
import functools

import jax
import jax.numpy as jnp
from jax import lax
from jax.experimental import pallas as pl
from jax.experimental.pallas import tpu as pltpu

IGNORE_INDEX = 255

# TODO(synk): optional per-class `weight` (module default weight=None) not implemented.


def _ce_kernel(logits_ref, target_ref, sum_ref, cnt_ref, sum_acc, cnt_acc,
               *, hw, tiles_per_split, need_mask):
    si = pl.program_id(1)          # pixel-range split (parallel)
    pj = pl.program_id(2)          # pixel tile within the split (reduction)

    # Zero the lane-wise accumulators at the start of each (image, split) loop.
    @pl.when(pj == 0)
    def _():
        sum_acc[...] = jnp.zeros_like(sum_acc)
        cnt_acc[...] = jnp.zeros_like(cnt_acc)

    lg = logits_ref[0].astype(jnp.float32)       # (C, TILE_P): classes on sublanes
    tgt = target_ref[0].astype(jnp.int32)        # (1, TILE_P)
    c, tile_p = lg.shape

    # Numerically stable log-sum-exp over the class (sublane) axis.
    m = jnp.max(lg, axis=0, keepdims=True)                       # (1, TILE_P)
    # Target-class logit picked from the RAW logits (single live (C,TILE_P) chain).
    class_ids = lax.broadcasted_iota(jnp.int32, (c, tile_p), 0)
    picked = jnp.sum(jnp.where(class_ids == tgt, lg, 0.0),
                     axis=0, keepdims=True)                      # (1, TILE_P)
    esum = jnp.sum(jnp.exp(lg - m), axis=0, keepdims=True)       # (1, TILE_P)
    loss_row = jnp.log(esum) + m - picked                        # (1, TILE_P)

    valid_ignore = tgt != IGNORE_INDEX                           # (1, TILE_P)

    def _accum(valid):
        sum_acc[...] += jnp.where(valid, loss_row, 0.0)
        cnt_acc[...] += valid.astype(jnp.float32)

    if not need_mask:
        # Whole pixel range is exactly covered: no bounds mask anywhere.
        _accum(valid_ignore)
    else:
        full_tiles = hw // tile_p                 # tiles fully inside [0, hw)
        g = si * tiles_per_split + pj             # global pixel-tile index

        @pl.when(g < full_tiles)
        def _():                                   # interior tiles: cheap path
            _accum(valid_ignore)

        @pl.when(g >= full_tiles)
        def _():                                   # boundary / padded tiles
            lane = lax.broadcasted_iota(jnp.int32, (1, tile_p), 1)
            in_bounds = (g * tile_p + lane) < hw
            _accum(valid_ignore & in_bounds)

    # Final cross-lane reduction + scalar store, once per (image, split).
    @pl.when(pj == pl.num_programs(2) - 1)
    def _():
        sum_ref[...] = jnp.sum(sum_acc[...]).reshape(1, 1, 1)
        cnt_ref[...] = jnp.sum(cnt_acc[...]).reshape(1, 1, 1)


def _pick_tile_p(c, hw, itemsize):
    # ~4 MiB logits block in the SOURCE dtype: amortizes the ~0.35 us per-step
    # overhead and stays well inside VMEM once double-buffered. Multiple of 128.
    budget = 4 * 1024 * 1024
    tp = (budget // (c * itemsize)) // 128 * 128
    tp = max(128, min(tp, 65536))
    tp = min(tp, pl.cdiv(hw, 128) * 128)
    return int(tp)


@functools.partial(jax.jit, static_argnames=("tile_p",))
def cross_entropy_loss_2d(output, target, tile_p=None):
    """output: (N, C, H, W) float logits, target: (N, H, W) int labels -> scalar mean loss."""
    n, c, h, w = output.shape
    hw = h * w
    if tile_p is None:
        tile_p = _pick_tile_p(c, hw, output.dtype.itemsize)

    logits = output.reshape(n, c, hw)                      # free reshape (no transpose)
    if not jnp.issubdtype(target.dtype, jnp.integer):
        target = target.astype(jnp.int32)                  # only if not already integer
    tgt = target.reshape(n, 1, hw)                         # layout-free reshape

    total_tiles = pl.cdiv(hw, tile_p)
    # Keep both TensorCores busy on v7x even when N == 1.
    n_splits = 2 if (n == 1 and total_tiles >= 2) else 1
    tps = pl.cdiv(total_tiles, n_splits)
    need_mask = (n_splits * tps * tile_p) != hw

    def _pix_idx(si, pj):
        # Clamp so padded tiles past the array never DMA out of range
        # (their contribution is zeroed in-kernel by the bounds mask).
        return jnp.minimum(si * tps + pj, total_tiles - 1)

    grid = (n, n_splits, tps)

    sum_out, cnt_out = pl.pallas_call(
        functools.partial(_ce_kernel, hw=hw, tiles_per_split=tps,
                          need_mask=need_mask),
        out_shape=(
            jax.ShapeDtypeStruct((n, n_splits, 1), jnp.float32),
            jax.ShapeDtypeStruct((n, n_splits, 1), jnp.float32),
        ),
        grid_spec=pltpu.PrefetchScalarGridSpec(
            num_scalar_prefetch=0,
            grid=grid,
            in_specs=[
                pl.BlockSpec((1, c, tile_p),
                             lambda ni, si, pj: (ni, 0, _pix_idx(si, pj))),
                pl.BlockSpec((1, 1, tile_p),
                             lambda ni, si, pj: (ni, 0, _pix_idx(si, pj))),
            ],
            out_specs=[
                pl.BlockSpec((1, 1, 1), lambda ni, si, pj: (ni, si, 0)),
                pl.BlockSpec((1, 1, 1), lambda ni, si, pj: (ni, si, 0)),
            ],
            scratch_shapes=[
                pltpu.VMEM((1, tile_p), jnp.float32),   # per-lane loss partials
                pltpu.VMEM((1, tile_p), jnp.float32),   # per-lane valid counts
            ],
        ),
        compiler_params=pltpu.CompilerParams(
            # batch & split axes parallel (megacore); pixel-tile axis accumulates.
            dimension_semantics=("parallel", "parallel", "arbitrary"),
            # 2x logits block (double-buffer) + ~3-4 (C,TILE_P) f32 temporaries
            # + row scratch; 48 MiB leaves headroom on v7x's 64 MiB VMEM.
            vmem_limit_bytes=48 * 1024 * 1024,
        ),
    )(logits, tgt)

    # reduction='mean' with weight=None: sum over valid pixels / #valid pixels.
    total = jnp.sum(sum_out)
    count = jnp.sum(cnt_out)
    return (total / count).astype(output.dtype)


def _reference(output, target):
    # Plain-JAX reference for sanity checking.
    n, c, h, w = output.shape
    logits = jnp.transpose(output, (0, 2, 3, 1)).reshape(-1, c).astype(jnp.float32)
    tgt = target.reshape(-1).astype(jnp.int32)
    valid = tgt != IGNORE_INDEX
    safe_tgt = jnp.where(valid, tgt, 0)
    logp = jax.nn.log_softmax(logits, axis=-1)
    nll = -jnp.take_along_axis(logp, safe_tgt[:, None], axis=-1)[:, 0]
    nll = jnp.where(valid, nll, 0.0)
    return jnp.sum(nll) / jnp.sum(valid.astype(jnp.float32))


if __name__ == "__main__":
    key = jax.random.PRNGKey(0)

    # --- Test 1: default sizing (no splits, no ragged tail) ------------------
    k1, k2, k3, key = jax.random.split(key, 4)
    N, C, H, W = 2, 4, 16, 16
    output = jax.random.normal(k1, (N, C, H, W), dtype=jnp.float32)
    target = jax.random.randint(k2, (N, H, W), 0, C, dtype=jnp.int32)
    ignore_mask = jax.random.uniform(k3, (N, H, W)) < 0.1
    target = jnp.where(ignore_mask, IGNORE_INDEX, target)

    loss = cross_entropy_loss_2d(output, target)
    jax.block_until_ready(loss)
    ref = _reference(output, target)
    assert jnp.allclose(loss, ref, atol=1e-5, rtol=1e-5), (loss, ref)

    # --- Test 2: N == 1 with forced small tile -> exercises the split grid,
    #             the ragged-tail mask path and the clamped padded tile. ------
    k1, k2, k3, key = jax.random.split(key, 4)
    N2, C2, H2, W2 = 1, 5, 18, 18          # hw=324, tile_p=128 -> 3 tiles, 2 splits
    output2 = jax.random.normal(k1, (N2, C2, H2, W2), dtype=jnp.float32)
    target2 = jax.random.randint(k2, (N2, H2, W2), 0, C2, dtype=jnp.int32)
    ignore_mask2 = jax.random.uniform(k3, (N2, H2, W2)) < 0.1
    target2 = jnp.where(ignore_mask2, IGNORE_INDEX, target2)

    loss2 = cross_entropy_loss_2d(output2, target2, tile_p=128)
    jax.block_until_ready(loss2)
    ref2 = _reference(output2, target2)
    assert jnp.allclose(loss2, ref2, atol=1e-5, rtol=1e-5), (loss2, ref2)

    print("KERNEL_OK")
</pallas_src>

<mosaic_0001>
module attributes {stable_mosaic.version = 11 : i64} {
  func.func @_ce_kernel(%arg0: i32, %arg1: i32, %arg2: i32, %arg3: memref<1x4x256xf32, #tpu.memory_space<vmem>>, %arg4: memref<1x1x256xi32, #tpu.memory_space<vmem>>, %arg5: memref<1x1x1xf32, #tpu.memory_space<vmem>>, %arg6: memref<1x1x1xf32, #tpu.memory_space<vmem>>, %arg7: memref<1x256xf32, #tpu.memory_space<vmem>>, %arg8: memref<1x256xf32, #tpu.memory_space<vmem>>) attributes {dimension_semantics = [#tpu.dimension_semantics<parallel>, #tpu.dimension_semantics<parallel>, #tpu.dimension_semantics<arbitrary>], iteration_bounds = array<i64: 2, 1, 1>, scalar_prefetch = 0 : i64, scratch_operands = 2 : i64, tpu.core_type = #tpu.core_type<tc>, window_params = [{transform_indices = @transform_0, window_bounds = array<i64: 1, 4, 256>}, {transform_indices = @transform_1, window_bounds = array<i64: 1, 1, 256>}, {transform_indices = @transform_2, window_bounds = array<i64: 1, 1, 1>}, {transform_indices = @transform_3, window_bounds = array<i64: 1, 1, 1>}]} {
    %c0_i32 = arith.constant 0 : i32
    %0 = arith.cmpi eq, %arg2, %c0_i32 : i32
    %1 = arith.extui %0 : i1 to i32
    %c0_i32_0 = arith.constant 0 : i32
    %2 = arith.cmpi ne, %1, %c0_i32_0 : i32
    scf.if %2 {
      %cst_20 = arith.constant 0.000000e+00 : f32
      %39 = vector.broadcast %cst_20 : f32 to vector<1x256xf32>
      %c0_21 = arith.constant 0 : index
      %c0_22 = arith.constant 0 : index
      %40 = vector.load %arg7[%c0_21, %c0_22] : memref<1x256xf32, #tpu.memory_space<vmem>>, vector<1x256xf32>
      tpu.vector_store %arg7[%c0_21, %c0_22], %39 {strides = array<i32>} : memref<1x256xf32, #tpu.memory_space<vmem>>, vector<1x256xf32>,
      %cst_23 = arith.constant 0.000000e+00 : f32
      %41 = vector.broadcast %cst_23 : f32 to vector<1x256xf32>
      %c0_24 = arith.constant 0 : index
      %c0_25 = arith.constant 0 : index
      %42 = vector.load %arg8[%c0_24, %c0_25] : memref<1x256xf32, #tpu.memory_space<vmem>>, vector<1x256xf32>
      tpu.vector_store %arg8[%c0_24, %c0_25], %41 {strides = array<i32>} : memref<1x256xf32, #tpu.memory_space<vmem>>, vector<1x256xf32>,
    } else {
    }
    %c0 = arith.constant 0 : index
    %c0_1 = arith.constant 0 : index
    %c0_2 = arith.constant 0 : index
    %3 = vector.load %arg3[%c0, %c0_1, %c0_2] : memref<1x4x256xf32, #tpu.memory_space<vmem>>, vector<1x4x256xf32>
    %4 = vector.shape_cast %3 : vector<1x4x256xf32> to vector<4x256xf32>
    %c0_3 = arith.constant 0 : index
    %c0_4 = arith.constant 0 : index
    %c0_5 = arith.constant 0 : index
    %5 = vector.load %arg4[%c0_3, %c0_4, %c0_5] : memref<1x1x256xi32, #tpu.memory_space<vmem>>, vector<1x1x256xi32>
    %6 = vector.shape_cast %5 : vector<1x1x256xi32> to vector<1x256xi32>
    %cst = arith.constant dense<0xFF800000> : vector<256xf32>
    %7 = vector.multi_reduction <maximumf>, %4, %cst [0] : vector<4x256xf32> to vector<256xf32>
    %8 = vector.shape_cast %7 : vector<256xf32> to vector<1x256xf32>
    %9 = tpu.iota {dimensions = array<i32: 0>} : vector<4x256xi32>
    %10 = vector.broadcast %6 : vector<1x256xi32> to vector<4x256xi32>
    %11 = arith.cmpi eq, %9, %10 : vector<4x256xi32>
    %cst_6 = arith.constant 0.000000e+00 : f32
    %12 = vector.broadcast %cst_6 : f32 to vector<4x256xf32>
    %13 = arith.select %11, %4, %12 : vector<4x256xi1>, vector<4x256xf32>
    %cst_7 = arith.constant dense<0.000000e+00> : vector<256xf32>
    %14 = vector.multi_reduction <add>, %13, %cst_7 [0] : vector<4x256xf32> to vector<256xf32>
    %15 = vector.shape_cast %14 : vector<256xf32> to vector<1x256xf32>
    %16 = vector.broadcast %8 : vector<1x256xf32> to vector<4x256xf32>
    %17 = arith.subf %4, %16 : vector<4x256xf32>
    %18 = math.exp %17 : vector<4x256xf32>
    %cst_8 = arith.constant dense<0.000000e+00> : vector<256xf32>
    %19 = vector.multi_reduction <add>, %18, %cst_8 [0] : vector<4x256xf32> to vector<256xf32>
    %20 = vector.shape_cast %19 : vector<256xf32> to vector<1x256xf32>
    %21 = math.log %20 : vector<1x256xf32>
    %22 = arith.addf %21, %8 : vector<1x256xf32>
    %23 = arith.subf %22, %15 : vector<1x256xf32>
    %c255_i32 = arith.constant 255 : i32
    %24 = vector.broadcast %c255_i32 : i32 to vector<1x256xi32>
    %25 = arith.cmpi ne, %6, %24 : vector<1x256xi32>
    %c0_9 = arith.constant 0 : index
    %c0_10 = arith.constant 0 : index
    %26 = vector.load %arg7[%c0_9, %c0_10] : memref<1x256xf32, #tpu.memory_space<vmem>>, vector<1x256xf32>
    %cst_11 = arith.constant 0.000000e+00 : f32
    %27 = vector.broadcast %cst_11 : f32 to vector<1x256xf32>
    %28 = arith.select %25, %23, %27 : vector<1x256xi1>, vector<1x256xf32>
    %29 = arith.addf %26, %28 : vector<1x256xf32>
    %c0_12 = arith.constant 0 : index
    %c0_13 = arith.constant 0 : index
    %30 = vector.load %arg7[%c0_12, %c0_13] : memref<1x256xf32, #tpu.memory_space<vmem>>, vector<1x256xf32>
    tpu.vector_store %arg7[%c0_12, %c0_13], %29 {strides = array<i32>} : memref<1x256xf32, #tpu.memory_space<vmem>>, vector<1x256xf32>,
    %c0_14 = arith.constant 0 : index
    %c0_15 = arith.constant 0 : index
    %31 = vector.load %arg8[%c0_14, %c0_15] : memref<1x256xf32, #tpu.memory_space<vmem>>, vector<1x256xf32>
    %32 = arith.extui %25 : vector<1x256xi1> to vector<1x256xi32>
    %33 = arith.sitofp %32 : vector<1x256xi32> to vector<1x256xf32>
    %34 = arith.addf %31, %33 : vector<1x256xf32>
    %c0_16 = arith.constant 0 : index
    %c0_17 = arith.constant 0 : index
    %35 = vector.load %arg8[%c0_16, %c0_17] : memref<1x256xf32, #tpu.memory_space<vmem>>, vector<1x256xf32>
    tpu.vector_store %arg8[%c0_16, %c0_17], %34 {strides = array<i32>} : memref<1x256xf32, #tpu.memory_space<vmem>>, vector<1x256xf32>,
    %c0_i32_18 = arith.constant 0 : i32
    %36 = arith.cmpi eq, %arg2, %c0_i32_18 : i32
    %37 = arith.extui %36 : i1 to i32
    %c0_i32_19 = arith.constant 0 : i32
    %38 = arith.cmpi ne, %37, %c0_i32_19 : i32
    scf.if %38 {
      %c0_20 = arith.constant 0 : index
      %c0_21 = arith.constant 0 : index
      %39 = vector.load %arg7[%c0_20, %c0_21] : memref<1x256xf32, #tpu.memory_space<vmem>>, vector<1x256xf32>
      %40 = vector.shape_cast %39 : vector<1x256xf32> to vector<1x1x256xf32>
      %cst_22 = arith.constant dense<0.000000e+00> : vector<1xf32>
      %41 = vector.multi_reduction <add>, %40, %cst_22 [1, 2] : vector<1x1x256xf32> to vector<1xf32>
      %42 = vector.shape_cast %41 : vector<1xf32> to vector<1x1x1xf32>
      %43 = vector.extract %42[0, 0, 0] : f32 from vector<1x1x1xf32>
      %44 = vector.broadcast %43 : f32 to vector<1x1x1xf32>
      %c0_23 = arith.constant 0 : index
      %c0_24 = arith.constant 0 : index
      %c0_25 = arith.constant 0 : index
      %45 = vector.load %arg5[%c0_23, %c0_24, %c0_25] : memref<1x1x1xf32, #tpu.memory_space<vmem>>, vector<1x1x1xf32>
      tpu.vector_store %arg5[%c0_23, %c0_24, %c0_25], %44 {strides = array<i32>} : memref<1x1x1xf32, #tpu.memory_space<vmem>>, vector<1x1x1xf32>,
      %c0_26 = arith.constant 0 : index
      %c0_27 = arith.constant 0 : index
      %46 = vector.load %arg8[%c0_26, %c0_27] : memref<1x256xf32, #tpu.memory_space<vmem>>, vector<1x256xf32>
      %47 = vector.shape_cast %46 : vector<1x256xf32> to vector<1x1x256xf32>
      %cst_28 = arith.constant dense<0.000000e+00> : vector<1xf32>
      %48 = vector.multi_reduction <add>, %47, %cst_28 [1, 2] : vector<1x1x256xf32> to vector<1xf32>
      %49 = vector.shape_cast %48 : vector<1xf32> to vector<1x1x1xf32>
      %50 = vector.extract %49[0, 0, 0] : f32 from vector<1x1x1xf32>
      %51 = vector.broadcast %50 : f32 to vector<1x1x1xf32>
      %c0_29 = arith.constant 0 : index
      %c0_30 = arith.constant 0 : index
      %c0_31 = arith.constant 0 : index
      %52 = vector.load %arg6[%c0_29, %c0_30, %c0_31] : memref<1x1x1xf32, #tpu.memory_space<vmem>>, vector<1x1x1xf32>
      tpu.vector_store %arg6[%c0_29, %c0_30, %c0_31], %51 {strides = array<i32>} : memref<1x1x1xf32, #tpu.memory_space<vmem>>, vector<1x1x1xf32>,
    } else {
    }
    return
  }
  func.func @transform_0(%arg0: i32, %arg1: i32, %arg2: i32) -> (i32, i32, i32) {
    %c1_i32 = arith.constant 1 : i32
    %0 = arith.muli %arg1, %c1_i32 : i32
    %1 = arith.addi %0, %arg2 : i32
    %c0_i32 = arith.constant 0 : i32
    %2 = arith.minsi %1, %c0_i32 : i32
    %c0_i32_0 = arith.constant 0 : i32
    %c0_i32_1 = arith.constant 0 : i32
    return %arg0, %c0_i32_0, %2 : i32, i32, i32
  }
  func.func @transform_1(%arg0: i32, %arg1: i32, %arg2: i32) -> (i32, i32, i32) {
    %c1_i32 = arith.constant 1 : i32
    %0 = arith.muli %arg1, %c1_i32 : i32
    %1 = arith.addi %0, %arg2 : i32
    %c0_i32 = arith.constant 0 : i32
    %2 = arith.minsi %1, %c0_i32 : i32
    %c0_i32_0 = arith.constant 0 : i32
    %c0_i32_1 = arith.constant 0 : i32
    return %arg0, %c0_i32_0, %2 : i32, i32, i32
  }
  func.func @transform_2(%arg0: i32, %arg1: i32, %arg2: i32) -> (i32, i32, i32) {
    %c0_i32 = arith.constant 0 : i32
    %c0_i32_0 = arith.constant 0 : i32
    return %arg0, %arg1, %c0_i32 : i32, i32, i32
  }
  func.func @transform_3(%arg0: i32, %arg1: i32, %arg2: i32) -> (i32, i32, i32) {
    %c0_i32 = arith.constant 0 : i32
    %c0_i32_0 = arith.constant 0 : i32
    return %arg0, %arg1, %c0_i32 : i32, i32, i32
  }
}

</mosaic_0001>

<llo_original>
// kernel: cross_entropy_loss_2d.1
$region0: #{cross_entropy_loss_2d.1}
  #allocation0 [shape = 'u32[]', space=smem, size = 0x4, offset = 0x4, fixed_abs, tag = 'smem constant byte address 0x4 - core index']
  #allocation1 [shape = 'u32[144,128]{1,0:T(1,128)}', space=vmem, size = 0x12000, scoped, tag = 'internal scratch']
  #allocation2 [shape = 'f32[1,256]{1,0:T(1,128)}', space=vmem, size = 0x400, scoped, tag = 'scratch operand']
  #allocation3 [shape = 'f32[1,256]{1,0:T(1,128)}', space=vmem, size = 0x400, scoped, tag = 'scratch operand']
  %s0 = inlined_call_operand.vmem [shape: f32[2,4,256], index: 0, kind: input, shape index: {}]
  %s1 = inlined_call_operand.vmem [shape: s32[2,1,256], index: 1, kind: input, shape index: {}]
  %s2 = inlined_call_operand.vmem [shape: f32[2,1,1], index: 2, kind: output, shape index: {0}]
  %s3 = inlined_call_operand.vmem [shape: f32[2,1,1], index: 3, kind: output, shape index: {1}]
  %4 = xla_tuple %s2, %s3
  %s5 = sld [smem:[#allocation0]]
  $region57: #{cross_entropy_loss_2d.1} parent=0
    _
  %s7 = ssub.s32 1, %s5
  %s8 = scalar_select 0, %s7, %s5
  loop: start=0, step=1, limit=4
  $region2: #{cross_entropy_loss_2d.1} parent=0 // loop_pre_header
    _
  $region3: #{cross_entropy_loss_2d.1} parent=0 // loop_header
    %s10 = sphi 0, %s14
    %p11 = scmp.ge.s32.totalorder %s10, 4
    %s17 = sphi 0, %s36
    %s18 = sphi 0, %s32
    %s19 = sphi 0, %s28
    %s20 = sphi 0, %s17
    %s21 = sphi 0, %s18
    %s22 = sphi 0, %s19
    %s23 = sphi 0, %s20
    %s24 = sphi 0, %s21
    %s25 = sphi 0, %s22
    %s47 = sphi 0, %s49
    %s50 = sphi 0, %s47
    %s51 = sphi 0, %s50
    %s67 = sphi 0, %s51
    %s81 = sphi 0, %s83
    %s84 = sphi 0, %s81
    %s85 = sphi 0, %s84
    %s101 = sphi 0, %s85
    %s109 = sphi 0, %s111
    %s112 = sphi 0, %s109
    %s113 = sphi 0, %s112
    %s129 = sphi 0, %s113
    %s137 = sphi 0, %s139
    %s140 = sphi 0, %s137
    %s141 = sphi 0, %s140
    %s157 = sphi 0, %s141
  $region4: #{cross_entropy_loss_2d.1} parent=0 // loop_header_branch
    %13 = sbr.rel (%p11) target = $region8
  $region5: #{cross_entropy_loss_2d.1} parent=0 // loop_body
    %s15 = ssub.s32 %s10, 1
    %s16 = ssub.s32 %s10, 2
    %s26 = sadd.s32 1, %s19
    %p27 = scmp.ge.s32.totalorder %s26, 1
    %s28 = scalar_select %p27, 0, %s26
    %s29 = sadd.s32 1, %s18
    %s30 = scalar_select %p27, %s29, %s18
    %p31 = scmp.ge.s32.totalorder %s30, 1
    %s32 = scalar_select %p31, 0, %s30
    %s33 = sadd.s32 1, %s17
    %s34 = scalar_select %p31, %s33, %s17
    %p35 = scmp.ge.s32.totalorder %s34, 2
    %s36 = scalar_select %p35, 0, %s34
    %s37 = sadd.s32 %s18, %s19
    %p38 = scmp.lt.s32.totalorder %s37, 0
    %s39 = scalar_select %p38, %s37, 0
    %s40 = sadd.s32 %s32, %s28
    %p41 = scmp.lt.s32.totalorder %s40, 0
    %s42 = scalar_select %p41, %s40, 0
    %s43 = ssub.s32 %s17, %s36
    %s44 = ssub.s32 %s39, %s42
    %s45 = sor.u32 %s43, %s44
    %p46 = scmp.eq.s32.totalorder %s45, 0
    %s48 = sadd.s32 %s47, 1
    %s49 = scalar_select %p46, %s47, %s48
    %p52 = pneg %p46
    %p53 = scmp.eq.s32.totalorder %s10, 1
    %p54 = por %p52, %p53
    %p55 = scmp.ne.s32.totalorder %s47, %s50
    %p56 = scmp.eq.s32.totalorder %s10, 0
    %p57 = por %p55, %p56
    %p58 = scmp.ne.s32.totalorder %s47, %s50
    %p59 = scmp.eq.s32.totalorder %s15, 1
    %p60 = por %p58, %p59
    %p61 = scmp.ne.s32.totalorder %s50, %s51
    %p62 = scmp.eq.s32.totalorder %s15, 0
    %p63 = por %p61, %p62
    %p64 = scmp.ne.s32.totalorder %s50, %s51
    %p65 = scmp.eq.s32.totalorder %s16, 1
    %p66 = por %p64, %p65
    %p68 = scmp.ne.s32.totalorder %s51, %s67
    %p69 = scmp.eq.s32.totalorder %s16, 0
    %p70 = por %p68, %p69
    %s71 = sadd.s32 %s18, %s19
    %p72 = scmp.lt.s32.totalorder %s71, 0
    %s73 = scalar_select %p72, %s71, 0
    %s74 = sadd.s32 %s32, %s28
    %p75 = scmp.lt.s32.totalorder %s74, 0
    %s76 = scalar_select %p75, %s74, 0
    %s77 = ssub.s32 %s17, %s36
    %s78 = ssub.s32 %s73, %s76
    %s79 = sor.u32 %s77, %s78
    %p80 = scmp.eq.s32.totalorder %s79, 0
    %s82 = sadd.s32 %s81, 1
    %s83 = scalar_select %p80, %s81, %s82
    %p86 = pneg %p80
    %p87 = scmp.eq.s32.totalorder %s10, 1
    %p88 = por %p86, %p87
    %p89 = scmp.ne.s32.totalorder %s81, %s84
    %p90 = scmp.eq.s32.totalorder %s10, 0
    %p91 = por %p89, %p90
    %p92 = scmp.ne.s32.totalorder %s81, %s84
    %p93 = scmp.eq.s32.totalorder %s15, 1
    %p94 = por %p92, %p93
    %p95 = scmp.ne.s32.totalorder %s84, %s85
    %p96 = scmp.eq.s32.totalorder %s15, 0
    %p97 = por %p95, %p96
    %p98 = scmp.ne.s32.totalorder %s84, %s85
    %p99 = scmp.eq.s32.totalorder %s16, 1
    %p100 = por %p98, %p99
    %p102 = scmp.ne.s32.totalorder %s85, %s101
    %p103 = scmp.eq.s32.totalorder %s16, 0
    %p104 = por %p102, %p103
    %s105 = ssub.s32 %s17, %s36
    %s106 = ssub.s32 %s18, %s32
    %s107 = sor.u32 %s105, %s106
    %p108 = scmp.eq.s32.totalorder %s107, 0
    %s110 = sadd.s32 %s109, 1
    %s111 = scalar_select %p108, %s109, %s110
    %p114 = pneg %p108
    %p115 = scmp.eq.s32.totalorder %s10, 1
    %p116 = por %p114, %p115
    %p117 = scmp.ne.s32.totalorder %s109, %s112
    %p118 = scmp.eq.s32.totalorder %s10, 0
    %p119 = por %p117, %p118
    %p120 = scmp.ne.s32.totalorder %s109, %s112
    %p121 = scmp.eq.s32.totalorder %s15, 1
    %p122 = por %p120, %p121
    %p123 = scmp.ne.s32.totalorder %s112, %s113
    %p124 = scmp.eq.s32.totalorder %s15, 0
    %p125 = por %p123, %p124
    %p126 = scmp.ne.s32.totalorder %s112, %s113
    %p127 = scmp.eq.s32.totalorder %s16, 1
    %p128 = por %p126, %p127
    %p130 = scmp.ne.s32.totalorder %s113, %s129
    %p131 = scmp.eq.s32.totalorder %s16, 0
    %p132 = por %p130, %p131
    %s133 = ssub.s32 %s17, %s36
    %s134 = ssub.s32 %s18, %s32
    %s135 = sor.u32 %s133, %s134
    %p136 = scmp.eq.s32.totalorder %s135, 0
    %s138 = sadd.s32 %s137, 1
    %s139 = scalar_select %p136, %s137, %s138
    %p142 = pneg %p136
    %p143 = scmp.eq.s32.totalorder %s10, 1
    %p144 = por %p142, %p143
    %p145 = scmp.ne.s32.totalorder %s137, %s140
    %p146 = scmp.eq.s32.totalorder %s10, 0
    %p147 = por %p145, %p146
    %p148 = scmp.ne.s32.totalorder %s137, %s140
    %p149 = scmp.eq.s32.totalorder %s15, 1
    %p150 = por %p148, %p149
    %p151 = scmp.ne.s32.totalorder %s140, %s141
    %p152 = scmp.eq.s32.totalorder %s15, 0
    %p153 = por %p151, %p152
    %p154 = scmp.ne.s32.totalorder %s140, %s141
    %p155 = scmp.eq.s32.totalorder %s16, 1
    %p156 = por %p154, %p155
    %p158 = scmp.ne.s32.totalorder %s141, %s157
    %p159 = scmp.eq.s32.totalorder %s16, 0
    %p160 = por %p158, %p159
    %p161 = scmp.le.s32.totalorder 1, %s10
    %p162 = scmp.lt.s32.totalorder %s10, 3
    %p163 = pnand %p161, %p162
    %p164 = pneg %p163
    // Predicated region
    $region9: #{cross_entropy_loss_2d.1} parent=5 // pred_check
      _
    $region10: #{cross_entropy_loss_2d.1} parent=5 // pred_check_branch
      %166 = sbr.rel (%p163) target = $region12
    $region11: #{cross_entropy_loss_2d.1} parent=5 // pred_region
      %s167 = ssub.s32 %s10, 1
    $region12: #{cross_entropy_loss_2d.1} parent=5 // pred_fallthru
      _
    %p168 = scmp.lt.s32.totalorder %s10, 2
    // Predicated region
    $region13: #{cross_entropy_loss_2d.1} parent=5 // pred_check
      %p169 = pneg %p168
    $region14: #{cross_entropy_loss_2d.1} parent=5 // pred_check_branch
      %171 = sbr.rel (%p169) target = $region16
    $region15: #{cross_entropy_loss_2d.1} parent=5 // pred_region
      // Predicated region
      $region17: #{cross_entropy_loss_2d.1} parent=15 // pred_check
        %p172 = pneg %p57
      $region18: #{cross_entropy_loss_2d.1} parent=15 // pred_check_branch
        %174 = sbr.rel (%p172) target = $region20
      $region19: #{cross_entropy_loss_2d.1} parent=15 // pred_region
        %s175 = sadd.s32 %s18, %s19
        %p176 = scmp.lt.s32.totalorder %s175, 0
        %s177 = scalar_select %p176, %s175, 0
        %s178 = smul.u32 2, %s177
        %p179 = scmp.lt.s32.totalorder %s17, 1
        %s180 = scalar_select %p179, %s17, 1
        %p181 = scmp.lt.s32.totalorder %s178, 1
        %s182 = scalar_select %p181, %s178, 1
        %s183 = smul.addr %s180, 2
        %s184 = sadd.s32 %s182, %s183
        %s185 = smul.addr %s184, 4
        %s186 = scalar_lea.vmem %s0, %s185
        %s187 = sadd.s32 %s18, %s19
        %p188 = scmp.lt.s32.totalorder %s187, 0
        %s189 = scalar_select %p188, %s187, 0
        %s190 = smul.u32 2, %s189
      $region20: #{cross_entropy_loss_2d.1} parent=15 // pred_fallthru
        _
      // Predicated region
      $region21: #{cross_entropy_loss_2d.1} parent=15 // pred_check
        %p191 = pneg %p91
      $region22: #{cross_entropy_loss_2d.1} parent=15 // pred_check_branch
        %193 = sbr.rel (%p191) target = $region24
      $region23: #{cross_entropy_loss_2d.1} parent=15 // pred_region
        %s194 = sadd.s32 %s18, %s19
        %p195 = scmp.lt.s32.totalorder %s194, 0
        %s196 = scalar_select %p195, %s194, 0
        %s197 = smul.u32 2, %s196
        %p198 = scmp.lt.s32.totalorder %s17, 1
        %s199 = scalar_select %p198, %s17, 1
        %p200 = scmp.lt.s32.totalorder %s197, 1
        %s201 = scalar_select %p200, %s197, 1
        %s202 = smul.addr %s199, 2
        %s203 = sadd.s32 %s201, %s202
        %s204 = scalar_lea.vmem %s1, %s203
        %s205 = sadd.s32 %s18, %s19
        %p206 = scmp.lt.s32.totalorder %s205, 0
        %s207 = scalar_select %p206, %s205, 0
        %s208 = smul.u32 2, %s207
      $region24: #{cross_entropy_loss_2d.1} parent=15 // pred_fallthru
        _
    $region16: #{cross_entropy_loss_2d.1} parent=5 // pred_fallthru
      _
    %p209 = scmp.le.s32.totalorder 1, %s10
    %p210 = scmp.lt.s32.totalorder %s10, 3
    %p211 = pnand %p209, %p210
    %p212 = pneg %p211
    // Predicated region
    $region25: #{cross_entropy_loss_2d.1} parent=5 // pred_check
      _
    $region26: #{cross_entropy_loss_2d.1} parent=5 // pred_check_branch
      %214 = sbr.rel (%p211) target = $region28
    $region27: #{cross_entropy_loss_2d.1} parent=5 // pred_region
      %s215 = ssub.s32 %s10, 1
      %s216 = sadd.s32 %s21, %s22
      %p217 = scmp.lt.s32.totalorder %s216, 0
      %s218 = scalar_select %p217, %s216, 0
      %s219 = smul.u32 2, %s218
      %p220 = scmp.lt.s32.totalorder %s20, 1
      %s221 = scalar_select %p220, %s20, 1
      %p222 = scmp.lt.s32.totalorder %s219, 1
      %s223 = scalar_select %p222, %s219, 1
      %s224 = smul.addr %s221, 2
      %s225 = sadd.s32 %s223, %s224
      %s226 = smul.addr %s225, 4
      %s227 = scalar_lea.vmem %s0, %s226
      %p228 = pneg %p63
      %p229 = pneg %p60
      %s230 = sadd.s32 %s21, %s22
      %p231 = scmp.lt.s32.totalorder %s230, 0
      %s232 = scalar_select %p231, %s230, 0
      %s233 = smul.u32 2, %s232
      %p234 = scmp.lt.s32.totalorder %s20, 1
      %s235 = scalar_select %p234, %s20, 1
      %p236 = scmp.lt.s32.totalorder %s233, 1
      %s237 = scalar_select %p236, %s233, 1
      %s238 = smul.addr %s235, 2
      %s239 = sadd.s32 %s237, %s238
      %s240 = scalar_lea.vmem %s1, %s239
      %p241 = pneg %p97
      %p242 = pneg %p94
      %p243 = pneg %p125
      %p244 = pneg %p122
      %p245 = scmp.lt.s32.totalorder %s20, 1
      %s246 = scalar_select %p245, %s20, 1
      %p247 = scmp.lt.s32.totalorder %s21, 0
      %s248 = scalar_select %p247, %s21, 0
      %s249 = sadd.s32 %s248, %s246
      %s250 = scalar_lea.vmem %s2, %s249
      %p251 = pneg %p153
      %p252 = pneg %p150
      %p253 = scmp.lt.s32.totalorder %s20, 1
      %s254 = scalar_select %p253, %s20, 1
      %p255 = scmp.lt.s32.totalorder %s21, 0
      %s256 = scalar_select %p255, %s21, 0
      %s257 = sadd.s32 %s256, %s254
      %s258 = scalar_lea.vmem %s3, %s257
      %s259 = sadd.s32 %s21, %s22
      %p260 = scmp.lt.s32.totalorder %s259, 0
      %s261 = scalar_select %p260, %s259, 0
      %s262 = smul.u32 2, %s261
      %p263 = scmp.lt.s32.totalorder %s20, 1
      %s264 = scalar_select %p263, %s20, 1
      %p265 = scmp.lt.s32.totalorder %s262, 1
      %s266 = scalar_select %p265, %s262, 1
      %s267 = smul.addr %s264, 2
      %s268 = sadd.s32 %s266, %s267
      %s269 = smul.addr %s268, 4
      %s270 = scalar_lea.vmem %s0, %s269
      %s271 = sadd.s32 %s21, %s22
      %p272 = scmp.lt.s32.totalorder %s271, 0
      %s273 = scalar_select %p272, %s271, 0
      %s274 = smul.u32 2, %s273
      %s275 = sadd.s32 %s21, %s22
      %p276 = scmp.lt.s32.totalorder %s275, 0
      %s277 = scalar_select %p276, %s275, 0
      %s278 = smul.u32 2, %s277
      %p279 = scmp.lt.s32.totalorder %s20, 1
      %s280 = scalar_select %p279, %s20, 1
      %p281 = scmp.lt.s32.totalorder %s278, 1
      %s282 = scalar_select %p281, %s278, 1
      %s283 = smul.addr %s280, 2
      %s284 = sadd.s32 %s282, %s283
      %s285 = scalar_lea.vmem %s1, %s284
      %s286 = sadd.s32 %s21, %s22
      %p287 = scmp.lt.s32.totalorder %s286, 0
      %s288 = scalar_select %p287, %s286, 0
      %s289 = smul.u32 2, %s288
      %p290 = scmp.lt.s32.totalorder %s20, 1
      %s291 = scalar_select %p290, %s20, 1
      %p292 = scmp.lt.s32.totalorder %s21, 0
      %s293 = scalar_select %p292, %s21, 0
      %s294 = sadd.s32 %s293, %s291
      %s295 = scalar_lea.vmem %s2, %s294
      %p296 = scmp.lt.s32.totalorder %s20, 1
      %s297 = scalar_select %p296, %s20, 1
      %p298 = scmp.lt.s32.totalorder %s21, 0
      %s299 = scalar_select %p298, %s21, 0
      %s300 = sadd.s32 %s299, %s297
      %s301 = scalar_lea.vmem %s3, %s300
      %p302 = scmp.eq.s32.totalorder %s22, 0
      // Predicated region
      $region29: #{cross_entropy_loss_2d.1} parent=27 // pred_check
        %p303 = pneg %p302
      $region30: #{cross_entropy_loss_2d.1} parent=27 // pred_check_branch
        %305 = sbr.rel (%p303) target = $region32
      $region31: #{cross_entropy_loss_2d.1} parent=27 // pred_region
        %v306 = vlaneseq
        %vm307 = vcmp.ge.s32.totalorder %v306, 0
        %vm308 = vcmp.lt.s32.totalorder %v306, 256
        %vm309 = vmand %vm307, %vm308
        %310 = vst.msk [vmem:[#allocation2] sm:$0x3] %vm309, 0.0
        %311 = vst.msk [vmem:[#allocation3] sm:$0x3] %vm309, 0.0
      $region32: #{cross_entropy_loss_2d.1} parent=27 // pred_fallthru
        _
      %v312 = vld [vmem:[%s270] sm:$0xff]
      %v313 = vld [vmem:[%s285] sm:$0x3]
      %v315 = vcombine.high %v312, %v312
      %vm317 = vcmask 1043456
      %v318 = vsel %vm317, %v312, -inf
      %v319 = vrot.slane %v318, 4
      %v320 = vmax.f32 %v318, %v319
      %v321 = vrot.slane %v320, 2
      %v322 = vmax.f32 %v320, %v321
      %v323 = vrot.slane %v322, 1
      %v324 = vmax.f32 %v322, %v323
      %v325 = vsel %vm317, %v315, -inf
      %v326 = vrot.slane %v325, 4
      %v327 = vmax.f32 %v325, %v326
      %v328 = vrot.slane %v327, 2
      %v329 = vmax.f32 %v327, %v328
      %v330 = vrot.slane %v329, 1
      %v331 = vmax.f32 %v329, %v330
      %v332 = vlaneseq
      %v333 = vshrl.u32 %v332, 7
      %v334 = vlaneseq
      %v335 = vshrl.u32 %v334, 7
      %v336 = vsub.s32 0, %v335
      %v337 = vrot.slane %v313, %v336
      %v338 = vlaneseq
      %v339 = vshrl.u32 %v338, 7
      %v340 = vsub.s32 1, %v339
      %v341 = vrot.slane %v313, %v340
      %vm342 = vcmp.eq.s32.totalorder %v333, %v337
      %vm343 = vcmp.eq.s32.totalorder %v333, %v341
      %v344 = vsel %vm342, %v312, 0.0
      %v345 = vsel %vm343, %v315, 0.0
      %v346 = vsel %vm317, %v344, 0.0
      %v347 = vrot.slane %v346, 4
      %v348 = vadd.f32 %v346, %v347
      %v349 = vrot.slane %v348, 2
      %v350 = vadd.f32 %v348, %v349
      %v351 = vrot.slane %v350, 1
      %v352 = vadd.f32 %v350, %v351
      %v353 = vsel %vm317, %v345, 0.0
      %v354 = vrot.slane %v353, 4
      %v355 = vadd.f32 %v353, %v354
      %v356 = vrot.slane %v355, 2
      %v357 = vadd.f32 %v355, %v356
      %v358 = vrot.slane %v357, 1
      %v359 = vadd.f32 %v357, %v358
      %v362 = vcombine.low %v324, %v331
      %v364 = vsub.f32 %v312, %v362
      %v365 = vmul.f32 %v364, 1.442695
      %v366 = vpow.pop %v365
      %v368 = vcombine.high %v366, %v366
      %v370 = vsel %vm317, %v366, 0.0
      %v371 = vrot.slane %v370, 4
      %v372 = vadd.f32 %v370, %v371
      %v373 = vrot.slane %v372, 2
      %v374 = vadd.f32 %v372, %v373
      %v375 = vrot.slane %v374, 1
      %v376 = vadd.f32 %v374, %v375
      %v377 = vsel %vm317, %v368, 0.0
      %v378 = vrot.slane %v377, 4
      %v379 = vadd.f32 %v377, %v378
      %v380 = vrot.slane %v379, 2
      %v381 = vadd.f32 %v379, %v380
      %v382 = vrot.slane %v381, 1
      %v383 = vadd.f32 %v381, %v382
      %v384 = vlog2.pop %v376
      %v385 = vmul.f32 %v384, 0.6931472
      %v386 = vlog2.pop %v383
      %v387 = vmul.f32 %v386, 0.6931472
      %v388 = vadd.f32 %v385, %v324
      %v389 = vadd.f32 %v387, %v331
      %v390 = vsub.f32 %v388, %v352
      %v391 = vsub.f32 %v389, %v359
      %vm392 = vcmp.ne.s32.totalorder %v313, 255
      %v393 = vld [vmem:[#allocation2] sm:$0x3]
      %v396 = vcombine.low %v390, %v391
      %v398 = vunpack.c.l.s4 1966171168
      %v399 = vunpack.c.0.s8 %v398
      %v400 = vlaneseq
      %v401 = vshrl.u32 %v400, 7
      %v402 = vsub.s32 %v399, %v401
      %v403 = vrot.slane %v396, %v402
      %v405 = vunpack.c.l.s4 1966171168
      %v406 = vunpack.c.0.s8 %v405
      %v407 = vlaneseq
      %v408 = vshrl.u32 %v407, 7
      %v409 = vsub.s32 %v406, %v408
      %v410 = vrot.slane %v403, %v409
      %v412 = vsel %vm392, %v410, 0.0
      %v413 = vadd.f32 %v393, %v412
      %v414 = vlaneseq
      %vm415 = vcmp.ge.s32.totalorder %v414, 0
      %vm416 = vcmp.lt.s32.totalorder %v414, 256
      %vm417 = vmand %vm415, %vm416
      %418 = vst.msk [vmem:[#allocation2] sm:$0x3] %vm417, %v413
      %v419 = vld [vmem:[#allocation3] sm:$0x3]
      %v420 = vsel %vm392, 1, 0
      %v421 = vcvt.s32.f32 %v420
      %v422 = vadd.f32 %v419, %v421
      %423 = vst.msk [vmem:[#allocation3] sm:$0x3] %vm417, %v422
      // Predicated region
      $region33: #{cross_entropy_loss_2d.1} parent=27 // pred_check
        %p424 = pneg %p302
      $region34: #{cross_entropy_loss_2d.1} parent=27 // pred_check_branch
        %426 = sbr.rel (%p424) target = $region36
      $region35: #{cross_entropy_loss_2d.1} parent=27 // pred_region
        %v427 = vld [vmem:[#allocation2] sm:$0x3]
        %v429 = vlaneseq
        %v430 = vshrl.u32 %v429, 7
        %v431 = vsub.s32 0, %v430
        %v432 = vrot.slane %v427, %v431
        %v433 = vlaneseq
        %v434 = vshrl.u32 %v433, 7
        %v435 = vsub.s32 1, %v434
        %v436 = vrot.slane %v427, %v435
        %vm439 = vcmask 1040384
        %v440 = vsel %vm439, %v432, 0.0
        %v441 = vsel %vm439, %v436, 0.0
        %v442 = vadd.f32 %v440, %v441
        %443 = vadd.xlane.f32.xlu0 %v442
        %v444 = vpop.xlane.xlu0 %443
        %v445 = vrot.slane %v444, 4
        %v446 = vadd.f32 %v444, %v445
        %v447 = vrot.slane %v446, 2
        %v448 = vadd.f32 %v446, %v447
        %v449 = vrot.slane %v448, 1
        %v450 = vadd.f32 %v448, %v449
        %s451 = vtos %v450
        %v452 = vstv %s451
        %vm453 = vcmask 0
        %454 = vst.msk [vmem:[%s295] sm:$0x1] %vm453, %v452
        %v455 = vld [vmem:[#allocation3] sm:$0x3]
        %v457 = vlaneseq
        %v458 = vshrl.u32 %v457, 7
        %v459 = vsub.s32 0, %v458
        %v460 = vrot.slane %v455, %v459
        %v461 = vlaneseq
        %v462 = vshrl.u32 %v461, 7
        %v463 = vsub.s32 1, %v462
        %v464 = vrot.slane %v455, %v463
        %v467 = vsel %vm439, %v460, 0.0
        %v468 = vsel %vm439, %v464, 0.0
        %v469 = vadd.f32 %v467, %v468
        %470 = vadd.xlane.f32.xlu0 %v469
        %v471 = vpop.xlane.xlu0 %470
        %v472 = vrot.slane %v471, 4
        %v473 = vadd.f32 %v471, %v472
        %v474 = vrot.slane %v473, 2
        %v475 = vadd.f32 %v473, %v474
        %v476 = vrot.slane %v475, 1
        %v477 = vadd.f32 %v475, %v476
        %s478 = vtos %v477
        %v479 = vstv %s478
        %480 = vst.msk [vmem:[%s301] sm:$0x1] %vm453, %v479
      $region36: #{cross_entropy_loss_2d.1} parent=27 // pred_fallthru
        _
      %p481 = scmp.lt.s32.totalorder %s20, 1
      %s482 = scalar_select %p481, %s20, 1
      %p483 = scmp.lt.s32.totalorder %s21, 0
      %s484 = scalar_select %p483, %s21, 0
      %s485 = sadd.s32 %s484, %s482
      %s486 = scalar_lea.vmem %s2, %s485
      %p487 = scmp.lt.s32.totalorder %s20, 1
      %s488 = scalar_select %p487, %s20, 1
      %p489 = scmp.lt.s32.totalorder %s21, 0
      %s490 = scalar_select %p489, %s21, 0
      %s491 = sadd.s32 %s490, %s488
      %s492 = scalar_lea.vmem %s3, %s491
      // Predicated region
      $region37: #{cross_entropy_loss_2d.1} parent=27 // pred_check
        %p493 = pneg %p122
      $region38: #{cross_entropy_loss_2d.1} parent=27 // pred_check_branch
        %495 = sbr.rel (%p493) target = $region40
      $region39: #{cross_entropy_loss_2d.1} parent=27 // pred_region
        _
      $region40: #{cross_entropy_loss_2d.1} parent=27 // pred_fallthru
        _
      // Predicated region
      $region41: #{cross_entropy_loss_2d.1} parent=27 // pred_check
        %p496 = pneg %p150
      $region42: #{cross_entropy_loss_2d.1} parent=27 // pred_check_branch
        %498 = sbr.rel (%p496) target = $region44
      $region43: #{cross_entropy_loss_2d.1} parent=27 // pred_region
        _
      $region44: #{cross_entropy_loss_2d.1} parent=27 // pred_fallthru
        _
    $region28: #{cross_entropy_loss_2d.1} parent=5 // pred_fallthru
      _
    %p499 = scmp.le.s32.totalorder 2, %s10
    // Predicated region
    $region45: #{cross_entropy_loss_2d.1} parent=5 // pred_check
      %p500 = pneg %p499
    $region46: #{cross_entropy_loss_2d.1} parent=5 // pred_check_branch
      %502 = sbr.rel (%p500) target = $region48
    $region47: #{cross_entropy_loss_2d.1} parent=5 // pred_region
      %s503 = ssub.s32 %s10, 2
      // Predicated region
      $region49: #{cross_entropy_loss_2d.1} parent=47 // pred_check
        %p504 = pneg %p128
      $region50: #{cross_entropy_loss_2d.1} parent=47 // pred_check_branch
        %506 = sbr.rel (%p504) target = $region52
      $region51: #{cross_entropy_loss_2d.1} parent=47 // pred_region
        %p507 = scmp.lt.s32.totalorder %s23, 1
        %s508 = scalar_select %p507, %s23, 1
        %p509 = scmp.lt.s32.totalorder %s24, 0
        %s510 = scalar_select %p509, %s24, 0
        %s511 = sadd.s32 %s510, %s508
        %s512 = scalar_lea.vmem %s2, %s511
      $region52: #{cross_entropy_loss_2d.1} parent=47 // pred_fallthru
        _
      // Predicated region
      $region53: #{cross_entropy_loss_2d.1} parent=47 // pred_check
        %p513 = pneg %p156
      $region54: #{cross_entropy_loss_2d.1} parent=47 // pred_check_branch
        %515 = sbr.rel (%p513) target = $region56
      $region55: #{cross_entropy_loss_2d.1} parent=47 // pred_region
        %p516 = scmp.lt.s32.totalorder %s23, 1
        %s517 = scalar_select %p516, %s23, 1
        %p518 = scmp.lt.s32.totalorder %s24, 0
        %s519 = scalar_select %p518, %s24, 0
        %s520 = sadd.s32 %s519, %s517
        %s521 = scalar_lea.vmem %s3, %s520
      $region56: #{cross_entropy_loss_2d.1} parent=47 // pred_fallthru
        _
    $region48: #{cross_entropy_loss_2d.1} parent=5 // pred_fallthru
      _
  $region6: #{cross_entropy_loss_2d.1} parent=0 // loop_footer
    %s14 = sadd.s32 1, %s10
  $region7: #{cross_entropy_loss_2d.1} parent=0 // loop_footer_branch
    %9 = sbr.rel target = $region3
  $region8: #{cross_entropy_loss_2d.1} parent=0 // loop_exit
    _

</llo_original>
